<compile_context>
chip_gen: v7x
topology: tpu7x:2x2x1
jax: 0.10.0
libtpu: 0.0.40
codegen_flags: <defaults>
</compile_context>

<pallas_src>
import functools

import jax
import jax.numpy as jnp
from jax.experimental import pallas as pl
from jax.experimental.pallas import tpu as pltpu


def _head_kernel(x_ref, w1_ref, b1_ref, w2_ref, b2_ref, o_ref, acc_ref):
    """One (tile_m, LP) output slab; grid = (m_tiles, k_steps), k last.

    x_ref : (tile_m, D)   activation tile            (compute dtype, bf16)
    w1_ref: (D, tk)       dense weight column slab   (compute dtype)
    b1_ref: (1, tk)       dense bias slab            (f32)
    w2_ref: (tk, LP)      out_proj weight row slab   (compute dtype)
    b2_ref: (1, LP)       out_proj bias, lane-padded (f32)
    o_ref : (tile_m, LP)  lane-dense output slab (same block across k)
    acc_ref:(tile_m, LP)  f32 accumulator scratch
    """
    k = pl.program_id(1)

    @pl.when(k == 0)
    def _():
        acc_ref[...] = jnp.zeros_like(acc_ref)

    # First matmul on the MXU (f32 accumulation) + f32 bias/tanh epilogue.
    h = jnp.dot(x_ref[...], w1_ref[...], preferred_element_type=jnp.float32)
    h = jnp.tanh(h + b1_ref[...])
    # Second matmul back in the (bf16) compute dtype for full MXU rate.
    acc_ref[...] += jnp.dot(h.astype(w2_ref.dtype), w2_ref[...],
                            preferred_element_type=jnp.float32)

    @pl.when(k == pl.num_programs(1) - 1)
    def _():
        o_ref[...] = (acc_ref[...] + b2_ref[...]).astype(o_ref.dtype)


@functools.lru_cache(maxsize=1)
def _single_buffering_supported():
    """Probe once whether pl.Buffered(1) (single-buffered grid-invariant blocks)
    lowers and compiles on this jax/libtpu. A tiny throwaway kernel is used
    instead of try/except around the real pallas_call, because under jax.jit
    the Mosaic lowering error surfaces at compile time outside the try block."""
    if not hasattr(pl, "Buffered"):
        return False
    try:
        spec = pl.BlockSpec((8, 128), lambda i: (0, 0),
                            pipeline_mode=pl.Buffered(1))

        def _probe(x_ref, o_ref):
            o_ref[...] = x_ref[...] + 1.0

        fn = pl.pallas_call(
            _probe,
            out_shape=jax.ShapeDtypeStruct((8, 128), jnp.float32),
            grid=(2,),
            in_specs=[spec],
            out_specs=pl.BlockSpec((8, 128), lambda i: (0, 0)),
        )
        jax.jit(fn).lower(jnp.zeros((8, 128), jnp.float32)).compile()
        return True
    except Exception:
        return False


def _vmem_capacity_bytes():
    """Physical per-TensorCore VMEM; conservative v7x default if unqueryable."""
    try:
        return int(pltpu.get_tpu_info().vmem_capacity_bytes)
    except Exception:
        return 64 << 20


def _choose_tile_m(M):
    """Pick the M tile: prefer no padding and >= 2 grid steps along M (keeps
    both v7x TensorCores busy), with the largest such tile (amortizes the
    ~0.35us per-grid-step overhead). Returns (tile_m, padded_M)."""
    if M <= 256:
        half = M // 2
        if half > 0 and M % 2 == 0 and half % 8 == 0:
            return half, M               # two tiles, no padding
        return M, M                      # single full-extent tile, no padding
    for t in (512, 256, 128, 64, 32):
        if M % t == 0 and M // t >= 2:
            return t, M                  # no padding
    # Ragged large M: minimal zero-padding (sliced off by the wrapper).
    return 256, pl.cdiv(M, 256) * 256


def _choose_tk(D, LP, w_itemsize, weight_budget_bytes):
    """K-split of the dense hidden dimension. tk == D keeps both weight
    matrices fully resident (single K step, single-buffered). For very wide
    d_model (mainly v7x: 64 MiB VMEM) tk is halved until the double-buffered
    per-step slabs W1(D,tk) + W2(tk,LP) fit the weight budget."""
    resident_bytes = D * (D + LP) * w_itemsize
    if resident_bytes <= weight_budget_bytes or D % 256 != 0:
        return D
    tk = D
    while (tk % 2 == 0 and (tk // 2) % 128 == 0
           and 2 * tk * (D + LP) * w_itemsize > weight_budget_bytes):
        tk //= 2
    return tk


def t5_classification_head(hidden_states, w_dense, b_dense, w_out, b_out, *,
                           use_bf16_matmul=True):
    """Eval-mode T5ClassificationHead forward.

    hidden_states: (B, S, d_model)
    w_dense: (d_model, d_model), b_dense: (d_model,)
    w_out:   (d_model, num_labels), b_out: (num_labels,)
    Returns (B, S, num_labels) in hidden_states.dtype.
    """
    B, S, D = hidden_states.shape
    L = w_out.shape[1]
    M = B * S
    out_dtype = hidden_states.dtype
    compute_dtype = jnp.bfloat16 if use_bf16_matmul else out_dtype
    cd_bytes = jnp.dtype(compute_dtype).itemsize
    out_bytes = jnp.dtype(out_dtype).itemsize

    # Lane-dense output: pad num_labels up to a multiple of 128 so the output
    # stores are unmasked full-width vst and the 2nd matmul fills MXU columns.
    LP = pl.cdiv(L, 128) * 128

    tile_m, Mp = _choose_tile_m(M)

    vmem_cap = _vmem_capacity_bytes()
    vmem_cap_usable = int(0.8 * vmem_cap)       # ~51 MiB v7x, ~102 MiB v5e/v6e
    tk = _choose_tk(D, LP, cd_bytes, vmem_cap_usable // 2)
    k_steps = D // tk

    single_buf = _single_buffering_supported()
    weights_invariant = (k_steps == 1)          # block index never changes

    def _spec(block_shape, index_map, invariant):
        if single_buf and invariant:
            # Grid-invariant blocks gain nothing from double-buffering; halving
            # their VMEM footprint keeps the resident-weight scheme alive.
            return pl.BlockSpec(block_shape, index_map,
                                pipeline_mode=pl.Buffered(1))
        return pl.BlockSpec(block_shape, index_map)

    in_specs = [
        pl.BlockSpec((tile_m, D), lambda i, k: (i, 0)),               # x tile
        _spec((D, tk),  lambda i, k: (0, k), weights_invariant),      # W_dense
        _spec((1, tk),  lambda i, k: (0, k), weights_invariant),      # b_dense
        _spec((tk, LP), lambda i, k: (k, 0), weights_invariant),      # W_out
        _spec((1, LP),  lambda i, k: (0, 0), True),                   # b_out
    ]
    out_spec = pl.BlockSpec((tile_m, LP), lambda i, k: (i, 0))

    # Operand preparation (bf16 casts for the MXU; biases stay f32).
    x2d = hidden_states.reshape(M, D).astype(compute_dtype)
    if Mp != M:
        # Rare path (large ragged M): minimal zero-padding of the token axis.
        x2d = jnp.pad(x2d, ((0, Mp - M), (0, 0)))
    w1 = w_dense.astype(compute_dtype)
    b1 = b_dense.astype(jnp.float32).reshape(1, D)
    w2 = jnp.pad(w_out, ((0, 0), (0, LP - L))).astype(compute_dtype)
    b2 = jnp.pad(b_out, ((0, LP - L),)).astype(jnp.float32).reshape(1, LP)

    # VMEM budget matching the actual buffering mode.
    w_bufs = 1 if (single_buf and weights_invariant) else 2
    b2_bufs = 1 if single_buf else 2
    vmem_need = (
        2 * tile_m * D * cd_bytes                      # x tile (double-buffered)
        + w_bufs * (D * tk * cd_bytes + tk * 4)        # W_dense + b_dense slabs
        + w_bufs * (tk * LP * cd_bytes)                # W_out slab
        + b2_bufs * LP * 4                             # b_out
        + 2 * tile_m * LP * out_bytes                  # output slab (double-buffered)
        + tile_m * LP * 4                              # f32 accumulator scratch
        + tile_m * tk * (4 + cd_bytes)                 # f32 h + bf16 copy for 2nd dot
        + tile_m * LP * 4                              # f32 partial product
    )
    vmem_limit = int(min(max(2 * vmem_need, 32 << 20), vmem_cap_usable))

    cost = pl.CostEstimate(
        flops=2 * Mp * D * D + 2 * Mp * D * LP,
        transcendentals=Mp * D,
        bytes_accessed=(Mp * D * cd_bytes
                        + D * D * cd_bytes + D * 4
                        + D * LP * cd_bytes + LP * 4
                        + Mp * LP * out_bytes),
    )

    out2d = pl.pallas_call(
        _head_kernel,
        out_shape=jax.ShapeDtypeStruct((Mp, LP), out_dtype),
        grid_spec=pltpu.PrefetchScalarGridSpec(
            num_scalar_prefetch=0,
            grid=(Mp // tile_m, k_steps),
            in_specs=in_specs,
            out_specs=out_spec,
            scratch_shapes=[pltpu.VMEM((tile_m, LP), jnp.float32)],
        ),
        compiler_params=pltpu.CompilerParams(
            dimension_semantics=("parallel", "arbitrary"),
            vmem_limit_bytes=vmem_limit,
        ),
        cost_estimate=cost,
    )(x2d, w1, b1, w2, b2)

    return out2d[:M, :L].reshape(B, S, L)


if __name__ == "__main__":
    # Small config consistent with the module: d_model=32, num_labels=4.
    batch, seq, d_model, num_labels = 2, 8, 32, 4

    key = jax.random.PRNGKey(0)
    k_x, k_w1, k_b1, k_w2, k_b2 = jax.random.split(key, 5)

    # Deterministic synthetic parameters (PyTorch Linear-style uniform bounds).
    bound = 1.0 / (d_model ** 0.5)
    w_dense = jax.random.uniform(k_w1, (d_model, d_model), jnp.float32, -bound, bound)
    b_dense = jax.random.uniform(k_b1, (d_model,), jnp.float32, -bound, bound)
    w_out = jax.random.uniform(k_w2, (d_model, num_labels), jnp.float32, -bound, bound)
    b_out = jax.random.uniform(k_b2, (num_labels,), jnp.float32, -bound, bound)

    hidden_states = jax.random.normal(k_x, (batch, seq, d_model), jnp.float32)

    out = t5_classification_head(hidden_states, w_dense, b_dense, w_out, b_out)
    out = jax.block_until_ready(out)

    # Pure-JAX f32 reference (eval-mode dropout = identity). The kernel runs its
    # matmuls with bf16 MXU operands (f32 accumulation), so compare at
    # bf16-level tolerance.
    ref = jnp.tanh(hidden_states @ w_dense + b_dense) @ w_out + b_out
    assert out.shape == (batch, seq, num_labels)
    assert jnp.allclose(out, ref, atol=5e-2, rtol=5e-2), (
        "max abs err = %f" % float(jnp.max(jnp.abs(out - ref))))

    print("KERNEL_OK")
</pallas_src>

<mosaic_0001>
module attributes {stable_mosaic.version = 11 : i64} {
  func.func @_head_kernel(%arg0: i32, %arg1: i32, %arg2: memref<8x32xbf16, #tpu.memory_space<vmem>>, %arg3: memref<32x32xbf16, #tpu.memory_space<vmem>>, %arg4: memref<1x32xf32, #tpu.memory_space<vmem>>, %arg5: memref<32x128xbf16, #tpu.memory_space<vmem>>, %arg6: memref<1x128xf32, #tpu.memory_space<vmem>>, %arg7: memref<8x128xf32, #tpu.memory_space<vmem>>, %arg8: memref<8x128xf32, #tpu.memory_space<vmem>>) attributes {dimension_semantics = [#tpu.dimension_semantics<parallel>, #tpu.dimension_semantics<arbitrary>], iteration_bounds = array<i64: 2, 1>, scalar_prefetch = 0 : i64, scratch_operands = 1 : i64, tpu.core_type = #tpu.core_type<tc>, window_params = [{transform_indices = @transform_0, window_bounds = array<i64: 8, 32>}, {transform_indices = @transform_1, window_bounds = array<i64: 32, 32>}, {transform_indices = @transform_2, window_bounds = array<i64: 1, 32>}, {transform_indices = @transform_3, window_bounds = array<i64: 32, 128>}, {pipeline_mode = #tpu.pipeline_mode<synchronous>, transform_indices = @transform_4, window_bounds = array<i64: 1, 128>}, {transform_indices = @transform_5, window_bounds = array<i64: 8, 128>}]} {
    %c0_i32 = arith.constant 0 : i32
    %0 = arith.cmpi eq, %arg1, %c0_i32 : i32
    %1 = arith.extui %0 : i1 to i32
    %c0_i32_0 = arith.constant 0 : i32
    %2 = arith.cmpi ne, %1, %c0_i32_0 : i32
    scf.if %2 {
      %cst_15 = arith.constant 0.000000e+00 : f32
      %19 = vector.broadcast %cst_15 : f32 to vector<8x128xf32>
      %c0_16 = arith.constant 0 : index
      %c0_17 = arith.constant 0 : index
      %20 = vector.load %arg8[%c0_16, %c0_17] : memref<8x128xf32, #tpu.memory_space<vmem>>, vector<8x128xf32>
      tpu.vector_store %arg8[%c0_16, %c0_17], %19 {strides = array<i32>} : memref<8x128xf32, #tpu.memory_space<vmem>>, vector<8x128xf32>,
    } else {
    }
    %c0 = arith.constant 0 : index
    %c0_1 = arith.constant 0 : index
    %3 = vector.load %arg2[%c0, %c0_1] : memref<8x32xbf16, #tpu.memory_space<vmem>>, vector<8x32xbf16>
    %c0_2 = arith.constant 0 : index
    %c0_3 = arith.constant 0 : index
    %4 = vector.load %arg3[%c0_2, %c0_3] : memref<32x32xbf16, #tpu.memory_space<vmem>>, vector<32x32xbf16>
    %cst = arith.constant dense<0.000000e+00> : vector<8x32xf32>
    %5 = tpu.matmul %3, %4, %cst {dimension_numbers = #tpu.dot_dimension_numbers<[1], [0], [0], [1], [0, 0, 1, 1], [], []>} : vector<8x32xbf16>, vector<32x32xbf16>, vector<8x32xf32> -> vector<8x32xf32>
    %c0_4 = arith.constant 0 : index
    %c0_5 = arith.constant 0 : index
    %6 = vector.load %arg4[%c0_4, %c0_5] : memref<1x32xf32, #tpu.memory_space<vmem>>, vector<1x32xf32>
    %7 = vector.broadcast %6 : vector<1x32xf32> to vector<8x32xf32>
    %8 = arith.addf %5, %7 : vector<8x32xf32>
    %9 = math.tanh %8 : vector<8x32xf32>
    %c0_6 = arith.constant 0 : index
    %c0_7 = arith.constant 0 : index
    %10 = vector.load %arg8[%c0_6, %c0_7] : memref<8x128xf32, #tpu.memory_space<vmem>>, vector<8x128xf32>
    %11 = arith.truncf %9 : vector<8x32xf32> to vector<8x32xbf16>
    %c0_8 = arith.constant 0 : index
    %c0_9 = arith.constant 0 : index
    %12 = vector.load %arg5[%c0_8, %c0_9] : memref<32x128xbf16, #tpu.memory_space<vmem>>, vector<32x128xbf16>
    %cst_10 = arith.constant dense<0.000000e+00> : vector<8x128xf32>
    %13 = tpu.matmul %11, %12, %cst_10 {dimension_numbers = #tpu.dot_dimension_numbers<[1], [0], [0], [1], [0, 0, 1, 1], [], []>} : vector<8x32xbf16>, vector<32x128xbf16>, vector<8x128xf32> -> vector<8x128xf32>
    %14 = arith.addf %10, %13 : vector<8x128xf32>
    %c0_11 = arith.constant 0 : index
    %c0_12 = arith.constant 0 : index
    %15 = vector.load %arg8[%c0_11, %c0_12] : memref<8x128xf32, #tpu.memory_space<vmem>>, vector<8x128xf32>
    tpu.vector_store %arg8[%c0_11, %c0_12], %14 {strides = array<i32>} : memref<8x128xf32, #tpu.memory_space<vmem>>, vector<8x128xf32>,
    %c0_i32_13 = arith.constant 0 : i32
    %16 = arith.cmpi eq, %arg1, %c0_i32_13 : i32
    %17 = arith.extui %16 : i1 to i32
    %c0_i32_14 = arith.constant 0 : i32
    %18 = arith.cmpi ne, %17, %c0_i32_14 : i32
    scf.if %18 {
      %c0_15 = arith.constant 0 : index
      %c0_16 = arith.constant 0 : index
      %19 = vector.load %arg8[%c0_15, %c0_16] : memref<8x128xf32, #tpu.memory_space<vmem>>, vector<8x128xf32>
      %c0_17 = arith.constant 0 : index
      %c0_18 = arith.constant 0 : index
      %20 = vector.load %arg6[%c0_17, %c0_18] : memref<1x128xf32, #tpu.memory_space<vmem>>, vector<1x128xf32>
      %21 = vector.broadcast %20 : vector<1x128xf32> to vector<8x128xf32>
      %22 = arith.addf %19, %21 : vector<8x128xf32>
      %c0_19 = arith.constant 0 : index
      %c0_20 = arith.constant 0 : index
      %23 = vector.load %arg7[%c0_19, %c0_20] : memref<8x128xf32, #tpu.memory_space<vmem>>, vector<8x128xf32>
      tpu.vector_store %arg7[%c0_19, %c0_20], %22 {strides = array<i32>} : memref<8x128xf32, #tpu.memory_space<vmem>>, vector<8x128xf32>,
    } else {
    }
    return
  }
  func.func @transform_0(%arg0: i32, %arg1: i32) -> (i32, i32) {
    %c0_i32 = arith.constant 0 : i32
    %c0_i32_0 = arith.constant 0 : i32
    return %arg0, %c0_i32 : i32, i32
  }
  func.func @transform_1(%arg0: i32, %arg1: i32) -> (i32, i32) {
    %c0_i32 = arith.constant 0 : i32
    %c0_i32_0 = arith.constant 0 : i32
    return %c0_i32, %arg1 : i32, i32
  }
  func.func @transform_2(%arg0: i32, %arg1: i32) -> (i32, i32) {
    %c0_i32 = arith.constant 0 : i32
    %c0_i32_0 = arith.constant 0 : i32
    return %c0_i32, %arg1 : i32, i32
  }
  func.func @transform_3(%arg0: i32, %arg1: i32) -> (i32, i32) {
    %c0_i32 = arith.constant 0 : i32
    %c0_i32_0 = arith.constant 0 : i32
    return %arg1, %c0_i32 : i32, i32
  }
  func.func @transform_4(%arg0: i32, %arg1: i32) -> (i32, i32) {
    %c0_i32 = arith.constant 0 : i32
    %c0_i32_0 = arith.constant 0 : i32
    %c0_i32_1 = arith.constant 0 : i32
    return %c0_i32, %c0_i32_0 : i32, i32
  }
  func.func @transform_5(%arg0: i32, %arg1: i32) -> (i32, i32) {
    %c0_i32 = arith.constant 0 : i32
    %c0_i32_0 = arith.constant 0 : i32
    return %arg0, %c0_i32 : i32, i32
  }
}

</mosaic_0001>

<llo_original>
// kernel: tpu_custom_call.1
$region0: #{tpu_custom_call.1}
  #allocation0 [shape = 'u32[]', space=smem, size = 0x4, offset = 0x4, fixed_abs, tag = 'smem constant byte address 0x4 - core index']
  #allocation1 [shape = 'u32[144,128]{1,0:T(1,128)}', space=vmem, size = 0x12000, scoped, tag = 'internal scratch']
  #allocation2 [shape = 'f32[8,128]{1,0:T(8,128)}', space=vmem, size = 0x1000, scoped, tag = 'scratch operand']
  %s0 = inlined_call_operand.hbm [shape: bf16[16,32], index: 0, kind: input, shape index: {}]
  %s1 = inlined_call_operand.hbm [shape: bf16[32,32], index: 1, kind: input, shape index: {}]
  %s2 = inlined_call_operand.vmem [shape: f32[1,32], index: 2, kind: input, shape index: {}]
  %s3 = inlined_call_operand.hbm [shape: bf16[32,128], index: 3, kind: input, shape index: {}]
  %s4 = inlined_call_operand.vmem [shape: f32[1,128], index: 4, kind: input, shape index: {}]
  %s5 = inlined_call_operand.hbm [shape: f32[16,128], index: 5, kind: output, shape index: {}]
  %s6 = sld [smem:[#allocation0]]
  $region73: #{tpu_custom_call.1} parent=0
    _
  %s8 = ssub.s32 1, %s6
  %s9 = scalar_select 0, %s8, %s6
  $region1: #{tpu_custom_call.1} parent=0
    #allocation3 [shape = 'u8[4096]{0}', space=vmem, size = 0x1000, scoped, tag = 'input window, operand 0']
    #allocation4 [shape = 's32[2]{0}', space=sflag, size = 0x8, scoped, tag = 'scoped memory for tpu_custom_call.1']
    #allocation5 [shape = 's32[2]{0}', space=sflag, size = 0x8, scoped, tag = 'scoped memory for tpu_custom_call.1']
    #allocation6 [shape = 'u8[8192]{0}', space=vmem, size = 0x2000, scoped, tag = 'input window, operand 1, single buffered']
    #allocation7 [shape = 's32[1]{0}', space=sflag, size = 0x4, scoped, tag = 'scoped memory for tpu_custom_call.1']
    #allocation8 [shape = 'u8[8192]{0}', space=vmem, size = 0x2000, scoped, tag = 'input window, operand 3, single buffered']
    #allocation9 [shape = 'u8[8192]{0}', space=vmem, size = 0x2000, scoped, tag = 'output window, operand 0']
    %10 = vsyncpa [#allocation4], 0
    %s11 = scalar_lea.sflag [#allocation4], 1
    %12 = vsyncpa %s11, 0
    %13 = vsyncpa [#allocation7], 0
    %14 = vsyncpa [#allocation5], 0
    %s15 = scalar_lea.sflag [#allocation5], 1
    %16 = vsyncpa %s15, 0
    loop: start=0, step=1, limit=4
    $region2: #{tpu_custom_call.1} parent=1 // loop_pre_header
      _
    $region3: #{tpu_custom_call.1} parent=1 // loop_header
      %s18 = sphi 0, %s22
      %p19 = scmp.ge.s32.totalorder %s18, 4
      %s25 = sphi 0, %s37
      %s26 = sphi 0, %s33
      %s27 = sphi 0, %s25
      %s28 = sphi 0, %s26
      %s29 = sphi 0, %s27
      %s30 = sphi 0, %s28
      %s40 = sphi 0, %s42
      %s43 = sphi 0, %s40
      %s44 = sphi 0, %s43
      %s60 = sphi 0, %s44
      %s66 = sphi 0, %s68
      %s69 = sphi 0, %s66
      %s70 = sphi 0, %s69
      %s86 = sphi 0, %s70
      %s92 = sphi 0, %s94
      %s95 = sphi 0, %s92
      %s96 = sphi 0, %s95
      %s112 = sphi 0, %s96
      %s118 = sphi 0, %s120
      %s121 = sphi 0, %s118
      %s122 = sphi 0, %s121
      %s138 = sphi 0, %s122
      %s142 = sphi 0, %s142
      %s144 = sphi 0, %s142
      %s145 = sphi 0, %s144
      %s159 = sphi 0, %s145
      %s165 = sphi 0, %s167
      %s168 = sphi 0, %s165
      %s169 = sphi 0, %s168
      %s185 = sphi 0, %s169
    $region4: #{tpu_custom_call.1} parent=1 // loop_header_branch
      %21 = sbr.rel (%p19) target = $region8
    $region5: #{tpu_custom_call.1} parent=1 // loop_body
      %s23 = ssub.s32 %s18, 1
      %s24 = ssub.s32 %s18, 2
      %s31 = sadd.s32 1, %s26
      %p32 = scmp.ge.s32.totalorder %s31, 1
      %s33 = scalar_select %p32, 0, %s31
      %s34 = sadd.s32 1, %s25
      %s35 = scalar_select %p32, %s34, %s25
      %p36 = scmp.ge.s32.totalorder %s35, 2
      %s37 = scalar_select %p36, 0, %s35
      %s38 = ssub.s32 %s25, %s37
      %p39 = scmp.eq.s32.totalorder %s38, 0
      %s41 = sadd.s32 %s40, 1
      %s42 = scalar_select %p39, %s40, %s41
      %p45 = pneg %p39
      %p46 = scmp.eq.s32.totalorder %s18, 1
      %p47 = por %p45, %p46
      %p48 = scmp.ne.s32.totalorder %s40, %s43
      %p49 = scmp.eq.s32.totalorder %s18, 0
      %p50 = por %p48, %p49
      %p51 = scmp.ne.s32.totalorder %s40, %s43
      %p52 = scmp.eq.s32.totalorder %s23, 1
      %p53 = por %p51, %p52
      %p54 = scmp.ne.s32.totalorder %s43, %s44
      %p55 = scmp.eq.s32.totalorder %s23, 0
      %p56 = por %p54, %p55
      %p57 = scmp.ne.s32.totalorder %s43, %s44
      %p58 = scmp.eq.s32.totalorder %s24, 1
      %p59 = por %p57, %p58
      %p61 = scmp.ne.s32.totalorder %s44, %s60
      %p62 = scmp.eq.s32.totalorder %s24, 0
      %p63 = por %p61, %p62
      %s64 = ssub.s32 %s26, %s33
      %p65 = scmp.eq.s32.totalorder %s64, 0
      %s67 = sadd.s32 %s66, 1
      %s68 = scalar_select %p65, %s66, %s67
      %p71 = pneg %p65
      %p72 = scmp.eq.s32.totalorder %s18, 1
      %p73 = por %p71, %p72
      %p74 = scmp.ne.s32.totalorder %s66, %s69
      %p75 = scmp.eq.s32.totalorder %s18, 0
      %p76 = por %p74, %p75
      %p77 = scmp.ne.s32.totalorder %s66, %s69
      %p78 = scmp.eq.s32.totalorder %s23, 1
      %p79 = por %p77, %p78
      %p80 = scmp.ne.s32.totalorder %s69, %s70
      %p81 = scmp.eq.s32.totalorder %s23, 0
      %p82 = por %p80, %p81
      %p83 = scmp.ne.s32.totalorder %s69, %s70
      %p84 = scmp.eq.s32.totalorder %s24, 1
      %p85 = por %p83, %p84
      %p87 = scmp.ne.s32.totalorder %s70, %s86
      %p88 = scmp.eq.s32.totalorder %s24, 0
      %p89 = por %p87, %p88
      %s90 = ssub.s32 %s26, %s33
      %p91 = scmp.eq.s32.totalorder %s90, 0
      %s93 = sadd.s32 %s92, 1
      %s94 = scalar_select %p91, %s92, %s93
      %p97 = pneg %p91
      %p98 = scmp.eq.s32.totalorder %s18, 1
      %p99 = por %p97, %p98
      %p100 = scmp.ne.s32.totalorder %s92, %s95
      %p101 = scmp.eq.s32.totalorder %s18, 0
      %p102 = por %p100, %p101
      %p103 = scmp.ne.s32.totalorder %s92, %s95
      %p104 = scmp.eq.s32.totalorder %s23, 1
      %p105 = por %p103, %p104
      %p106 = scmp.ne.s32.totalorder %s95, %s96
      %p107 = scmp.eq.s32.totalorder %s23, 0
      %p108 = por %p106, %p107
      %p109 = scmp.ne.s32.totalorder %s95, %s96
      %p110 = scmp.eq.s32.totalorder %s24, 1
      %p111 = por %p109, %p110
      %p113 = scmp.ne.s32.totalorder %s96, %s112
      %p114 = scmp.eq.s32.totalorder %s24, 0
      %p115 = por %p113, %p114
      %s116 = ssub.s32 %s26, %s33
      %p117 = scmp.eq.s32.totalorder %s116, 0
      %s119 = sadd.s32 %s118, 1
      %s120 = scalar_select %p117, %s118, %s119
      %p123 = pneg %p117
      %p124 = scmp.eq.s32.totalorder %s18, 1
      %p125 = por %p123, %p124
      %p126 = scmp.ne.s32.totalorder %s118, %s121
      %p127 = scmp.eq.s32.totalorder %s18, 0
      %p128 = por %p126, %p127
      %p129 = scmp.ne.s32.totalorder %s118, %s121
      %p130 = scmp.eq.s32.totalorder %s23, 1
      %p131 = por %p129, %p130
      %p132 = scmp.ne.s32.totalorder %s121, %s122
      %p133 = scmp.eq.s32.totalorder %s23, 0
      %p134 = por %p132, %p133
      %p135 = scmp.ne.s32.totalorder %s121, %s122
      %p136 = scmp.eq.s32.totalorder %s24, 1
      %p137 = por %p135, %p136
      %p139 = scmp.ne.s32.totalorder %s122, %s138
      %p140 = scmp.eq.s32.totalorder %s24, 0
      %p141 = por %p139, %p140
      %s143 = sadd.s32 %s142, 1
      %p146 = scmp.eq.s32.totalorder %s18, 1
      %p147 = scmp.ne.s32.totalorder %s142, %s144
      %p148 = scmp.eq.s32.totalorder %s18, 0
      %p149 = por %p147, %p148
      %p150 = scmp.ne.s32.totalorder %s142, %s144
      %p151 = scmp.eq.s32.totalorder %s23, 1
      %p152 = por %p150, %p151
      %p153 = scmp.ne.s32.totalorder %s144, %s145
      %p154 = scmp.eq.s32.totalorder %s23, 0
      %p155 = por %p153, %p154
      %p156 = scmp.ne.s32.totalorder %s144, %s145
      %p157 = scmp.eq.s32.totalorder %s24, 1
      %p158 = por %p156, %p157
      %p160 = scmp.ne.s32.totalorder %s145, %s159
      %p161 = scmp.eq.s32.totalorder %s24, 0
      %p162 = por %p160, %p161
      %s163 = ssub.s32 %s25, %s37
      %p164 = scmp.eq.s32.totalorder %s163, 0
      %s166 = sadd.s32 %s165, 1
      %s167 = scalar_select %p164, %s165, %s166
      %p170 = pneg %p164
      %p171 = scmp.eq.s32.totalorder %s18, 1
      %p172 = por %p170, %p171
      %p173 = scmp.ne.s32.totalorder %s165, %s168
      %p174 = scmp.eq.s32.totalorder %s18, 0
      %p175 = por %p173, %p174
      %p176 = scmp.ne.s32.totalorder %s165, %s168
      %p177 = scmp.eq.s32.totalorder %s23, 1
      %p178 = por %p176, %p177
      %p179 = scmp.ne.s32.totalorder %s168, %s169
      %p180 = scmp.eq.s32.totalorder %s23, 0
      %p181 = por %p179, %p180
      %p182 = scmp.ne.s32.totalorder %s168, %s169
      %p183 = scmp.eq.s32.totalorder %s24, 1
      %p184 = por %p182, %p183
      %p186 = scmp.ne.s32.totalorder %s169, %s185
      %p187 = scmp.eq.s32.totalorder %s24, 0
      %p188 = por %p186, %p187
      %p189 = scmp.le.s32.totalorder 1, %s18
      %p190 = scmp.lt.s32.totalorder %s18, 3
      %p191 = pnand %p189, %p190
      %p192 = pneg %p191
      // Predicated region
      $region9: #{tpu_custom_call.1} parent=5 // pred_check
        _
      $region10: #{tpu_custom_call.1} parent=5 // pred_check_branch
        %194 = sbr.rel (%p191) target = $region12
      $region11: #{tpu_custom_call.1} parent=5 // pred_region
        %s195 = ssub.s32 %s18, 1
        // Predicated region
        $region13: #{tpu_custom_call.1} parent=11 // pred_check
          %p196 = pneg %p82
        $region14: #{tpu_custom_call.1} parent=11 // pred_check_branch
          %198 = sbr.rel (%p196) target = $region16
        $region15: #{tpu_custom_call.1} parent=11 // pred_region
          %s200 = ssub.s32 256, 256
          %201 = vsyncadd [#allocation7], %s200
          %s202 = smul.addr %s28, 64
          %s203 = scalar_lea.hbm %s1, %s202
          %s204 = sshll.u32 [#allocation6], 4
          %s205 = int_to_ptr.vmem [resolvable:$true] %s204
          %210 = dma.hbm_to_vmem [thread:$0]  %s203, 256, %s205, [#allocation7], 64, 64, 4
        $region16: #{tpu_custom_call.1} parent=11 // pred_fallthru
          _
        // Predicated region
        $region17: #{tpu_custom_call.1} parent=11 // pred_check
          %p211 = pneg %p108
        $region18: #{tpu_custom_call.1} parent=11 // pred_check_branch
          %213 = sbr.rel (%p211) target = $region20
        $region19: #{tpu_custom_call.1} parent=11 // pred_region
          %p214 = scmp.lt.s32.totalorder %s28, 0
          %s215 = scalar_select %p214, %s28, 0
          %s216 = scalar_lea.vmem %s2, %s215
        $region20: #{tpu_custom_call.1} parent=11 // pred_fallthru
          _
        // Predicated region
        $region21: #{tpu_custom_call.1} parent=11 // pred_check
          %p217 = pneg %p134
        $region22: #{tpu_custom_call.1} parent=11 // pred_check_branch
          %219 = sbr.rel (%p217) target = $region24
        $region23: #{tpu_custom_call.1} parent=11 // pred_region
          %s220 = smul.u32 4, %s28
          %s222 = ssub.s32 256, 256
          %223 = vsyncadd [#allocation7], %s222
          %s224 = smul.addr %s220, 64
          %s225 = scalar_lea.hbm %s3, %s224
          %s226 = sshll.u32 [#allocation8], 4
          %s227 = int_to_ptr.vmem [resolvable:$true] %s226
          %232 = dma.hbm_to_vmem [thread:$0]  %s225, 256, %s227, [#allocation7], 64, 64, 4
        $region24: #{tpu_custom_call.1} parent=11 // pred_fallthru
          _
        // Predicated region
        $region25: #{tpu_custom_call.1} parent=11 // pred_check
          %p233 = pneg %p155
        $region26: #{tpu_custom_call.1} parent=11 // pred_check_branch
          %235 = sbr.rel (%p233) target = $region28
        $region27: #{tpu_custom_call.1} parent=11 // pred_region
          _
        $region28: #{tpu_custom_call.1} parent=11 // pred_fallthru
          _
      $region12: #{tpu_custom_call.1} parent=5 // pred_fallthru
        _
      %p236 = scmp.lt.s32.totalorder %s18, 2
      // Predicated region
      $region29: #{tpu_custom_call.1} parent=5 // pred_check
        %p237 = pneg %p236
      $region30: #{tpu_custom_call.1} parent=5 // pred_check_branch
        %239 = sbr.rel (%p237) target = $region32
      $region31: #{tpu_custom_call.1} parent=5 // pred_region
        // Predicated region
        $region33: #{tpu_custom_call.1} parent=31 // pred_check
          %p240 = pneg %p50
        $region34: #{tpu_custom_call.1} parent=31 // pred_check_branch
          %242 = sbr.rel (%p240) target = $region36
        $region35: #{tpu_custom_call.1} parent=31 // pred_region
          %s243 = sand.u32 %s40, 1
          %s244 = scalar_lea.sflag [#allocation4], %s243
          %s245 = sand.u32 %s40, 1
          %s246 = smul.addr %s245, 4
          %s247 = scalar_lea.vmem [#allocation3], %s246
          %s249 = ssub.s32 64, 64
          %250 = vsyncadd %s244, %s249
          %s251 = smul.addr %s25, 64
          %s252 = scalar_lea.hbm %s0, %s251
          %s254 = sshll.u32 %s247, 4
          %s255 = int_to_ptr.vmem [resolvable:$true] %s254
          %257 = dma.hbm_to_vmem [thread:$0]  %s252, 64, %s255, %s244
        $region36: #{tpu_custom_call.1} parent=31 // pred_fallthru
          _
      $region32: #{tpu_custom_call.1} parent=5 // pred_fallthru
        _
      %p258 = scmp.le.s32.totalorder 1, %s18
      %p259 = scmp.lt.s32.totalorder %s18, 3
      %p260 = pnand %p258, %p259
      %p261 = pneg %p260
      // Predicated region
      $region37: #{tpu_custom_call.1} parent=5 // pred_check
        _
      $region38: #{tpu_custom_call.1} parent=5 // pred_check_branch
        %263 = sbr.rel (%p260) target = $region40
      $region39: #{tpu_custom_call.1} parent=5 // pred_region
        %s264 = ssub.s32 %s18, 1
        %s265 = sand.u32 %s43, 1
        %s266 = scalar_lea.sflag [#allocation4], %s265
        %s267 = sand.u32 %s43, 1
        %s268 = smul.addr %s267, 4
        %s269 = scalar_lea.vmem [#allocation3], %s268
        // Predicated region
        $region41: #{tpu_custom_call.1} parent=39 // pred_check
          %p270 = pneg %p56
        $region42: #{tpu_custom_call.1} parent=39 // pred_check_branch
          %272 = sbr.rel (%p270) target = $region44
        $region43: #{tpu_custom_call.1} parent=39 // pred_region
          %273 = dma.done %s266, 64
        $region44: #{tpu_custom_call.1} parent=39 // pred_fallthru
          _
        // Predicated region
        $region45: #{tpu_custom_call.1} parent=39 // pred_check
          %p274 = pneg %p82
        $region46: #{tpu_custom_call.1} parent=39 // pred_check_branch
          %276 = sbr.rel (%p274) target = $region48
        $region47: #{tpu_custom_call.1} parent=39 // pred_region
          %277 = dma.done [#allocation7], 256
        $region48: #{tpu_custom_call.1} parent=39 // pred_fallthru
          _
        // Predicated region
        $region49: #{tpu_custom_call.1} parent=39 // pred_check
          %p278 = pneg %p134
        $region50: #{tpu_custom_call.1} parent=39 // pred_check_branch
          %280 = sbr.rel (%p278) target = $region52
        $region51: #{tpu_custom_call.1} parent=39 // pred_region
          %281 = dma.done [#allocation7], 256
        $region52: #{tpu_custom_call.1} parent=39 // pred_fallthru
          _
        %s282 = sand.u32 %s43, 1
        %s283 = scalar_lea.sflag [#allocation4], %s282
        %s284 = sand.u32 %s43, 1
        %s285 = smul.addr %s284, 4
        %s286 = scalar_lea.vmem [#allocation3], %s285
        %p287 = pneg %p56
        %p288 = pneg %p53
        %p289 = pneg %p82
        %p290 = pneg %p79
        %p291 = scmp.lt.s32.totalorder %s28, 0
        %s292 = scalar_select %p291, %s28, 0
        %s293 = scalar_lea.vmem %s2, %s292
        %p294 = pneg %p108
        %p295 = pneg %p105
        %p296 = pneg %p134
        %p297 = pneg %p131
        %p298 = pneg %p155
        %p299 = pneg %p152
        %p300 = pneg %p181
        %p301 = pneg %p178
        %s302 = sand.u32 %s168, 1
        %s303 = scalar_lea.sflag [#allocation5], %s302
        %s304 = sand.u32 %s168, 1
        %s305 = smul.addr %s304, 8
        %s306 = scalar_lea.vmem [#allocation9], %s305
        %p307 = scmp.lt.s32.totalorder %s28, 0
        %s308 = scalar_select %p307, %s28, 0
        %s309 = scalar_lea.vmem %s2, %s308
        %s310 = smul.u32 4, %s28
        %p312 = scmp.eq.s32.totalorder %s28, 0
        // Predicated region
        $region53: #{tpu_custom_call.1} parent=39 // pred_check
          %p313 = pneg %p312
        $region54: #{tpu_custom_call.1} parent=39 // pred_check_branch
          %315 = sbr.rel (%p313) target = $region56
        $region55: #{tpu_custom_call.1} parent=39 // pred_region
          %316 = vst [vmem:[#allocation2] sm:$0xff] 0.0
        $region56: #{tpu_custom_call.1} parent=39 // pred_fallthru
          _
        %v317 = vld [vmem:[%s269] sm:$0xf]
        %v318 = vld [vmem:[#allocation6] sm:$0xf]
        %v319 = vld [vmem:[#allocation6 + $0x4] sm:$0xf]
        %v320 = vld [vmem:[#allocation6 + $0x8] sm:$0xf]
        %v321 = vld [vmem:[#allocation6 + $0xc] sm:$0xf]
        %v322 = vld [vmem:[%s309] sm:$0x1]
        %v324 = vlaneseq
        %v325 = vshrl.u32 %v324, 7
        %v326 = vsub.s32 0, %v325
        %v327 = vrot.slane %v322, %v326
        %v333 = vunpack.c.l.b16 %v318
        %v334 = vunpack.c.l.b16 %v319
        %v335 = vunpack.c.l.b16 %v320
        %v336 = vunpack.c.l.b16 %v321
        %v337 = vpack.c.b16 %v334, %v333
        %v338 = vpack.c.b16 %v336, %v335
        %vm341 = vcmask 261120
        %v343 = vsel %vm341, %v317, 0
        %345 = vmatprep.subr.bf16.mxu0 0
        %346 = vmatpush1.bf16.msra.mxu0 %v337
        %347 = vmatprep.subr.bf16.mxu0 0
        %348 = vmatpush1.bf16.msra.mxu0 %v338
        %349 = vmatprep.subr.bf16.mxu0 0
        %350 = vmatpush1.bf16.msra.mxu0 0
        %351 = vmatprep.subr.bf16.mxu0 0
        %352 = vmatpush1.bf16.msra.mxu0 0
        %353 = vmatprep.subr.bf16.mxu0 0
        %354 = vmatpush1.bf16.msra.mxu0 0
        %355 = vmatprep.subr.bf16.mxu0 0
        %356 = vmatpush1.bf16.msra.mxu0 0
        %357 = vmatprep.subr.bf16.mxu0 0
        %358 = vmatpush1.bf16.msra.mxu0 0
        %359 = vmatprep.subr.bf16.mxu0 0
        %360 = vmatpush1.bf16.msra.mxu0 0
        %361 = vmatprep.subr.bf16.mxu0 0
        %362 = vmatpush1.bf16.msra.mxu0 0
        %363 = vmatprep.subr.bf16.mxu0 0
        %364 = vmatpush1.bf16.msra.mxu0 0
        %365 = vmatprep.subr.bf16.mxu0 0
        %366 = vmatpush1.bf16.msra.mxu0 0
        %367 = vmatprep.subr.bf16.mxu0 0
        %368 = vmatpush1.bf16.msra.mxu0 0
        %369 = vmatprep.subr.bf16.mxu0 0
        %370 = vmatpush1.bf16.msra.mxu0 0
        %371 = vmatprep.subr.bf16.mxu0 0
        %372 = vmatpush1.bf16.msra.mxu0 0
        %373 = vmatprep.subr.bf16.mxu0 0
        %374 = vmatpush1.bf16.msra.mxu0 0
        %375 = vmatprep.subr.bf16.mxu0 0
        %376 = vmatpush1.bf16.msra.mxu0 0
        %377 = vmatprep.mubr.bf16.mxu0 0
        %378 = vmatmul.mubr.bf16.gmra.mrb[0].mxu0 %v343
        %v379 = vpop.f32.mrb[0].mxu0
        %v380 = vadd.f32 %v327, %v379
        %v381 = vpop.f32.mrb[0].mxu0
        %v382 = vpop.f32.mrb[0].mxu0
        %v383 = vpop.f32.mrb[0].mxu0
        %384 = vdwg.mxu0
        %v385 = vtanh.pop %v380
        %v386 = vld [vmem:[#allocation2] sm:$0xff]
        %v387 = vpack.c.bf16 %v385, %v385
        %v388 = vld [vmem:[#allocation8] sm:$0xf]
        %v389 = vld [vmem:[#allocation8 + $0x4] sm:$0xf]
        %v390 = vld [vmem:[#allocation8 + $0x8] sm:$0xf]
        %v391 = vld [vmem:[#allocation8 + $0xc] sm:$0xf]
        %v396 = vunpack.c.l.b16 %v388
        %v397 = vunpack.c.l.b16 %v389
        %v398 = vunpack.c.l.b16 %v390
        %v399 = vunpack.c.l.b16 %v391
        %v400 = vpack.c.b16 %v397, %v396
        %v401 = vpack.c.b16 %v399, %v398
        %v405 = vsel %vm341, %v387, 0
        %407 = vmatprep.subr.bf16.mxu0 0
        %408 = vmatpush1.bf16.msra.mxu0 %v400
        %409 = vmatprep.subr.bf16.mxu0 0
        %410 = vmatpush1.bf16.msra.mxu0 %v401
        %411 = vmatprep.subr.bf16.mxu0 0
        %412 = vmatpush1.bf16.msra.mxu0 0
        %413 = vmatprep.subr.bf16.mxu0 0
        %414 = vmatpush1.bf16.msra.mxu0 0
        %415 = vmatprep.subr.bf16.mxu0 0
        %416 = vmatpush1.bf16.msra.mxu0 0
        %417 = vmatprep.subr.bf16.mxu0 0
        %418 = vmatpush1.bf16.msra.mxu0 0
        %419 = vmatprep.subr.bf16.mxu0 0
        %420 = vmatpush1.bf16.msra.mxu0 0
        %421 = vmatprep.subr.bf16.mxu0 0
        %422 = vmatpush1.bf16.msra.mxu0 0
        %423 = vmatprep.subr.bf16.mxu0 0
        %424 = vmatpush1.bf16.msra.mxu0 0
        %425 = vmatprep.subr.bf16.mxu0 0
        %426 = vmatpush1.bf16.msra.mxu0 0
        %427 = vmatprep.subr.bf16.mxu0 0
        %428 = vmatpush1.bf16.msra.mxu0 0
        %429 = vmatprep.subr.bf16.mxu0 0
        %430 = vmatpush1.bf16.msra.mxu0 0
        %431 = vmatprep.subr.bf16.mxu0 0
        %432 = vmatpush1.bf16.msra.mxu0 0
        %433 = vmatprep.subr.bf16.mxu0 0
        %434 = vmatpush1.bf16.msra.mxu0 0
        %435 = vmatprep.subr.bf16.mxu0 0
        %436 = vmatpush1.bf16.msra.mxu0 0
        %437 = vmatprep.subr.bf16.mxu0 0
        %438 = vmatpush1.bf16.msra.mxu0 0
        %439 = vmatprep.mubr.bf16.mxu0 0
        %440 = vmatmul.mubr.bf16.gmra.mrb[0].mxu0 %v405
        %v441 = vpop.f32.mrb[0].mxu0
        %v442 = vadd.f32 0.0, %v441
        %v443 = vpop.f32.mrb[0].mxu0
        %v444 = vpop.f32.mrb[0].mxu0
        %v445 = vpop.f32.mrb[0].mxu0
        %446 = vdwg.mxu0
        %v447 = vadd.f32 %v386, %v442
        %448 = vst [vmem:[#allocation2] sm:$0xff] %v447
        // Predicated region
        $region57: #{tpu_custom_call.1} parent=39 // pred_check
          %p449 = pneg %p312
        $region58: #{tpu_custom_call.1} parent=39 // pred_check_branch
          %451 = sbr.rel (%p449) target = $region60
        $region59: #{tpu_custom_call.1} parent=39 // pred_region
          %v452 = vld [vmem:[#allocation2] sm:$0xff]
          %v453 = vld [vmem:[%s4] sm:$0x1]
          %v455 = vlaneseq
          %v456 = vshrl.u32 %v455, 7
          %v457 = vsub.s32 0, %v456
          %v458 = vrot.slane %v453, %v457
          %v460 = vadd.f32 %v452, %v458
          %461 = vst [vmem:[%s306] sm:$0xff] %v460
        $region60: #{tpu_custom_call.1} parent=39 // pred_fallthru
          _
        %s462 = sand.u32 %s168, 1
        %s463 = scalar_lea.sflag [#allocation5], %s462
        %s464 = sand.u32 %s168, 1
        %s465 = smul.addr %s464, 8
        %s466 = scalar_lea.vmem [#allocation9], %s465
        // Predicated region
        $region61: #{tpu_custom_call.1} parent=39 // pred_check
          %p467 = pneg %p178
        $region62: #{tpu_custom_call.1} parent=39 // pred_check_branch
          %469 = sbr.rel (%p467) target = $region64
        $region63: #{tpu_custom_call.1} parent=39 // pred_region
          %s471 = ssub.s32 128, 128
          %472 = vsyncadd %s463, %s471
          %s473 = smul.addr %s27, 128
          %s474 = scalar_lea.hbm %s5, %s473
          %s476 = sshll.u32 %s466, 4
          %s477 = int_to_ptr.vmem [resolvable:$true] %s476
          %479 = dma.vmem_to_hbm [thread:$0]  %s477, 128, %s474, %s463
        $region64: #{tpu_custom_call.1} parent=39 // pred_fallthru
          _
      $region40: #{tpu_custom_call.1} parent=5 // pred_fallthru
        _
      %p480 = scmp.le.s32.totalorder 2, %s18
      // Predicated region
      $region65: #{tpu_custom_call.1} parent=5 // pred_check
        %p481 = pneg %p480
      $region66: #{tpu_custom_call.1} parent=5 // pred_check_branch
        %483 = sbr.rel (%p481) target = $region68
      $region67: #{tpu_custom_call.1} parent=5 // pred_region
        %s484 = ssub.s32 %s18, 2
        // Predicated region
        $region69: #{tpu_custom_call.1} parent=67 // pred_check
          %p485 = pneg %p184
        $region70: #{tpu_custom_call.1} parent=67 // pred_check_branch
          %487 = sbr.rel (%p485) target = $region72
        $region71: #{tpu_custom_call.1} parent=67 // pred_region
          %s488 = sand.u32 %s169, 1
          %s489 = scalar_lea.sflag [#allocation5], %s488
          %s490 = sand.u32 %s169, 1
          %s491 = smul.addr %s490, 8
          %s492 = scalar_lea.vmem [#allocation9], %s491
          %493 = dma.done %s489, 128
        $region72: #{tpu_custom_call.1} parent=67 // pred_fallthru
          _
      $region68: #{tpu_custom_call.1} parent=5 // pred_fallthru
        _
    $region6: #{tpu_custom_call.1} parent=1 // loop_footer
      %s22 = sadd.s32 1, %s18
    $region7: #{tpu_custom_call.1} parent=1 // loop_footer_branch
      %17 = sbr.rel target = $region3
    $region8: #{tpu_custom_call.1} parent=1 // loop_exit
      _
    %494 = vsyncpa [#allocation4], 1
    %s495 = scalar_lea.sflag [#allocation4], 1
    %496 = vsyncpa %s495, 1
    %497 = vsyncpa [#allocation7], 1
    %498 = vsyncpa [#allocation5], 1
    %s499 = scalar_lea.sflag [#allocation5], 1
    %500 = vsyncpa %s499, 1

</llo_original>
